<compile_context>
chip_gen: v6e
topology: v6e:2x2x1
jax: 0.10.0
libtpu: 0.0.40
codegen_flags: <defaults>
</compile_context>

<pallas_src>
import functools

import jax
import jax.numpy as jnp
from jax.experimental import pallas as pl
from jax.experimental.pallas import tpu as pltpu


def _round_up(x, m):
    return ((x + m - 1) // m) * m


def two_tower_kernel(x_ref, w1_ref, b1_ref, w2_ref, b2_ref, score_ref, *, h1_dim):
    """Fused user+item tower MLP on one batch tile.

    x_ref     : (tb, KU+KI)   [user_cat|hist|0pad | item_cat|0pad]   (compute dtype)
    w1_ref    : (KU+KI, 2*H0) block-diagonal layer-1 weight          (compute dtype)
    b1_ref    : (1, 2*H0)     f32
    w2_ref    : (2*H0, 2*H1)  block-diagonal layer-2 weight          (compute dtype)
    b2_ref    : (1, 2*H1)     f32
    score_ref : (1, 1, tb)    f32 lane-dense similarity scores
    """
    cd = w1_ref.dtype
    f32 = jnp.float32

    h1 = jnp.dot(x_ref[...], w1_ref[...], preferred_element_type=f32) + b1_ref[...]
    h1 = jnp.maximum(h1, 0.0)
    h2 = jnp.dot(h1.astype(cd), w2_ref[...], preferred_element_type=f32) + b2_ref[...]
    h2 = jnp.maximum(h2, 0.0)

    u = h2[:, :h1_dim]          # user embedding (tb, H1)
    it = h2[:, h1_dim:]         # item embedding (tb, H1)
    # Lane-dense (1, 1, tb) output; the sublane->lane relayout rides the idle XLU slot.
    score_ref[...] = jnp.sum(u * it, axis=-1).reshape(1, 1, -1)


@functools.partial(jax.jit, static_argnames=("batch_tile", "compute_dtype"))
def two_tower_forward(params, user_inputs, item_inputs, history_emb,
                      *, batch_tile=None, compute_dtype=jnp.bfloat16):
    user_id, age, gender, occupation, zipcode, context = user_inputs
    item_id, genre, year, item_context = item_inputs

    # Embedding lookups (gathers) + concat: plain-JAX glue outside the kernel.
    user_cat = jnp.concatenate([
        params["user_id_emb"][user_id],
        params["age_emb"][age],
        params["gender_emb"][gender],
        params["occupation_emb"][occupation],
        params["zip_emb"][zipcode],
        params["user_context_emb"][context],
    ], axis=-1).astype(jnp.float32)                         # [B, 68]

    item_cat = jnp.concatenate([
        params["item_id_emb"][item_id],
        params["genre_emb"][genre],
        params["year_emb"][year],
        params["item_context_emb"][item_context],
    ], axis=-1).astype(jnp.float32)                         # [B, 52]

    hist = history_emb.astype(jnp.float32)                  # [B, Dh]

    # Fold the (pre-ReLU, hence exactly linear) history projection into the first
    # user-MLP weight: (hist @ wh + bh) @ wu1_hist = hist @ (wh @ wu1_hist) + bh @ wu1_hist.
    wu1 = jnp.concatenate([params["wu1_cat"], params["wh"] @ params["wu1_hist"]], axis=0)
    bu1_eff = params["bu1"] + params["bh"] @ params["wu1_hist"]

    user_x = jnp.concatenate([user_cat, hist], axis=-1)     # [B, 68+Dh]
    user_in = user_x.shape[1]
    item_in = item_cat.shape[1]
    H0, H1 = params["wu2"].shape                            # (128, 64) by default

    # Pad contraction dims to 128-multiples and fuse both towers into one
    # block-diagonal MLP (built in f32, cast once below).
    KU = _round_up(user_in, 128)
    KI = _round_up(item_in, 128)
    w1 = jnp.zeros((KU + KI, 2 * H0), jnp.float32)
    w1 = w1.at[:user_in, :H0].set(wu1)
    w1 = w1.at[KU:KU + item_in, H0:].set(params["wi1"])
    b1 = jnp.concatenate([bu1_eff, params["bi1"]], axis=-1)          # (1, 2*H0)
    w2 = jnp.zeros((2 * H0, 2 * H1), jnp.float32)
    w2 = w2.at[:H0, :H1].set(params["wu2"])
    w2 = w2.at[H0:, H1:].set(params["wi2"])
    b2 = jnp.concatenate([params["bu2"], params["bi2"]], axis=-1)    # (1, 2*H1)

    B = user_x.shape[0]
    cd = jnp.dtype(compute_dtype)
    sub = 16 if cd.itemsize < 4 else 8            # bf16 packs 2 rows per sublane
    if batch_tile is None:
        # Large tiles amortize per-grid-step pipeline overhead; keep >=2 tiles
        # when B allows so the "parallel" axis feeds both v7x TensorCores.
        tb = max(sub, min(2048, int(pl.cdiv(B, 2))))
        align = 256 if tb >= 256 else sub         # 256-align large tiles (v6e/v7x MXU)
        tb = min(2048, _round_up(tb, align))
    else:
        tb = _round_up(batch_tile, sub)
    bp = _round_up(B, tb)
    num_tiles = bp // tb

    user_x_p = jnp.pad(user_x, ((0, bp - B), (0, KU - user_in)))
    item_p = jnp.pad(item_cat, ((0, bp - B), (0, KI - item_in)))
    x = jnp.concatenate([user_x_p, item_p], axis=-1).astype(cd)      # (bp, KU+KI)

    weights = [w1.astype(cd), b1, w2.astype(cd), b2]   # biases stay f32

    kernel = functools.partial(two_tower_kernel, h1_dim=int(H1))
    score = pl.pallas_call(
        kernel,
        out_shape=jax.ShapeDtypeStruct((num_tiles, 1, tb), jnp.float32),
        grid=(num_tiles,),
        in_specs=[pl.BlockSpec((tb, KU + KI), lambda i: (i, 0))]
                 + [pl.BlockSpec(w.shape, lambda i: (0, 0)) for w in weights],
        out_specs=pl.BlockSpec((1, 1, tb), lambda i: (i, 0, 0)),
        compiler_params=pltpu.CompilerParams(
            dimension_semantics=("parallel",),
            # Let XLA fuse the concat/pad/cast producer into the activation operand
            # so the (dominant) activation bytes are not round-tripped through HBM twice.
            allow_input_fusion=[True, False, False, False, False],
        ),
    )(x, *weights)

    return score.reshape(-1)[:B]                  # [B], matches PyTorch .sum(dim=-1)


def init_params(key,
                num_users, num_ages, num_genders, num_occupations, num_zipcodes,
                num_items, num_genres, num_years, num_contexts,
                history_embed_dim=32, embed_dim=32, hidden_dims=(128, 64)):
    ks = iter(jax.random.split(key, 32))
    n = lambda shape, s=0.1: (s * jax.random.normal(next(ks), shape)).astype(jnp.float32)

    h0, h1 = hidden_dims
    user_cat_dim = embed_dim + 8 + 4 + 8 + 8 + 8           # 68
    item_cat_dim = embed_dim + 8 + 4 + 8                   # 52

    return {
        # user tower embeddings
        "user_id_emb": n((num_users, embed_dim)),
        "age_emb": n((num_ages, 8)),
        "gender_emb": n((num_genders, 4)),
        "occupation_emb": n((num_occupations, 8)),
        "zip_emb": n((num_zipcodes, 8)),
        "user_context_emb": n((num_contexts, 8)),
        # item tower embeddings
        "item_id_emb": n((num_items, embed_dim)),
        "genre_emb": n((num_genres, 8)),
        "year_emb": n((num_years, 4)),
        "item_context_emb": n((num_contexts, 8)),
        # history projection Linear(history_embed_dim, 16)
        "wh": n((history_embed_dim, 16)),
        "bh": n((1, 16)),
        # user MLP layer 1: input = [user_cat(68), hist_proj(16)] -> h0
        "wu1_cat": n((user_cat_dim, h0)),
        "wu1_hist": n((16, h0)),
        "bu1": n((1, h0)),
        # user MLP layer 2
        "wu2": n((h0, h1)),
        "bu2": n((1, h1)),
        # item MLP
        "wi1": n((item_cat_dim, h0)),
        "bi1": n((1, h0)),
        "wi2": n((h0, h1)),
        "bi2": n((1, h1)),
    }


def _reference_forward(params, user_inputs, item_inputs, history_emb):
    """Pure-JAX reference (mirrors the PyTorch module exactly, no folding/fusing)."""
    user_id, age, gender, occupation, zipcode, context = user_inputs
    item_id, genre, year, item_context = item_inputs
    hist_p = history_emb @ params["wh"] + params["bh"]
    u_x = jnp.concatenate([
        params["user_id_emb"][user_id], params["age_emb"][age],
        params["gender_emb"][gender], params["occupation_emb"][occupation],
        params["zip_emb"][zipcode], params["user_context_emb"][context], hist_p], axis=-1)
    wu1 = jnp.concatenate([params["wu1_cat"], params["wu1_hist"]], axis=0)
    u = jax.nn.relu(u_x @ wu1 + params["bu1"])
    u = jax.nn.relu(u @ params["wu2"] + params["bu2"])
    i_x = jnp.concatenate([
        params["item_id_emb"][item_id], params["genre_emb"][genre],
        params["year_emb"][year], params["item_context_emb"][item_context]], axis=-1)
    i = jax.nn.relu(i_x @ params["wi1"] + params["bi1"])
    i = jax.nn.relu(i @ params["wi2"] + params["bi2"])
    return (u * i).sum(axis=-1)


def _make_inputs(key, B, cfg):
    (num_users, num_ages, num_genders, num_occupations, num_zipcodes,
     num_items, num_genres, num_years, num_contexts, history_embed_dim) = cfg
    ks = jax.random.split(key, 11)
    user_inputs = (
        jax.random.randint(ks[0], (B,), 0, num_users),
        jax.random.randint(ks[1], (B,), 0, num_ages),
        jax.random.randint(ks[2], (B,), 0, num_genders),
        jax.random.randint(ks[3], (B,), 0, num_occupations),
        jax.random.randint(ks[4], (B,), 0, num_zipcodes),
        jax.random.randint(ks[5], (B,), 0, num_contexts),
    )
    item_inputs = (
        jax.random.randint(ks[6], (B,), 0, num_items),
        jax.random.randint(ks[7], (B,), 0, num_genres),
        jax.random.randint(ks[8], (B,), 0, num_years),
        jax.random.randint(ks[9], (B,), 0, num_contexts),
    )
    history_emb = jax.random.normal(ks[10], (B, history_embed_dim), dtype=jnp.float32)
    return user_inputs, item_inputs, history_emb


if __name__ == "__main__":
    key = jax.random.PRNGKey(0)
    k_param, k_small, k_big = jax.random.split(key, 3)

    num_users, num_ages, num_genders, num_occupations, num_zipcodes = 50, 7, 2, 21, 100
    num_items, num_genres, num_years, num_contexts = 40, 10, 20, 5
    history_embed_dim, embed_dim, hidden_dims = 32, 32, (128, 64)
    cfg = (num_users, num_ages, num_genders, num_occupations, num_zipcodes,
           num_items, num_genres, num_years, num_contexts, history_embed_dim)

    params = init_params(k_param, num_users, num_ages, num_genders, num_occupations,
                         num_zipcodes, num_items, num_genres, num_years, num_contexts,
                         history_embed_dim, embed_dim, hidden_dims)

    # --- small batch: f32 (exact semantics) and bf16 (fast default), single tile ---
    B = 8
    user_inputs, item_inputs, history_emb = _make_inputs(k_small, B, cfg)
    ref = _reference_forward(params, user_inputs, item_inputs, history_emb)

    out_f32 = jax.block_until_ready(
        two_tower_forward(params, user_inputs, item_inputs, history_emb,
                          compute_dtype=jnp.float32))
    assert out_f32.shape == (B,)
    assert jnp.allclose(out_f32, ref, atol=1e-4, rtol=1e-4), (out_f32, ref)

    out_bf16 = jax.block_until_ready(
        two_tower_forward(params, user_inputs, item_inputs, history_emb))
    assert out_bf16.shape == (B,)
    assert jnp.allclose(out_bf16, ref, atol=5e-2, rtol=5e-2), (out_bf16, ref)

    # --- larger batch: exercises multi-tile grid + batch padding (bf16 default) ---
    B2 = 200
    user_inputs2, item_inputs2, history_emb2 = _make_inputs(k_big, B2, cfg)
    ref2 = _reference_forward(params, user_inputs2, item_inputs2, history_emb2)
    out2 = jax.block_until_ready(
        two_tower_forward(params, user_inputs2, item_inputs2, history_emb2))
    assert out2.shape == (B2,)
    assert jnp.allclose(out2, ref2, atol=5e-2, rtol=5e-2), (out2, ref2)

    print("KERNEL_OK")
</pallas_src>

<mosaic_0001>
module attributes {stable_mosaic.version = 11 : i64} {
  func.func @two_tower_kernel(%arg0: i32, %arg1: memref<8x256xf32, #tpu.memory_space<vmem>>, %arg2: memref<256x256xf32, #tpu.memory_space<vmem>>, %arg3: memref<1x256xf32, #tpu.memory_space<vmem>>, %arg4: memref<256x128xf32, #tpu.memory_space<vmem>>, %arg5: memref<1x128xf32, #tpu.memory_space<vmem>>, %arg6: memref<1x1x8xf32, #tpu.memory_space<vmem>>) attributes {dimension_semantics = [#tpu.dimension_semantics<parallel>], iteration_bounds = array<i64: 1>, scalar_prefetch = 0 : i64, scratch_operands = 0 : i64, tpu.core_type = #tpu.core_type<tc>, window_params = [{transform_indices = @transform_0, window_bounds = array<i64: 8, 256>}, {pipeline_mode = #tpu.pipeline_mode<synchronous>, transform_indices = @transform_1, window_bounds = array<i64: 256, 256>}, {pipeline_mode = #tpu.pipeline_mode<synchronous>, transform_indices = @transform_2, window_bounds = array<i64: 1, 256>}, {pipeline_mode = #tpu.pipeline_mode<synchronous>, transform_indices = @transform_3, window_bounds = array<i64: 256, 128>}, {pipeline_mode = #tpu.pipeline_mode<synchronous>, transform_indices = @transform_4, window_bounds = array<i64: 1, 128>}, {transform_indices = @transform_5, window_bounds = array<i64: 1, 1, 8>}]} {
    %c0 = arith.constant 0 : index
    %c0_0 = arith.constant 0 : index
    %0 = vector.load %arg1[%c0, %c0_0] : memref<8x256xf32, #tpu.memory_space<vmem>>, vector<8x256xf32>
    %c0_1 = arith.constant 0 : index
    %c0_2 = arith.constant 0 : index
    %1 = vector.load %arg2[%c0_1, %c0_2] : memref<256x256xf32, #tpu.memory_space<vmem>>, vector<256x256xf32>
    %cst = arith.constant dense<0.000000e+00> : vector<8x256xf32>
    %2 = tpu.matmul %0, %1, %cst {dimension_numbers = #tpu.dot_dimension_numbers<[1], [0], [0], [1], [0, 0, 1, 1], [], []>} : vector<8x256xf32>, vector<256x256xf32>, vector<8x256xf32> -> vector<8x256xf32>
    %c0_3 = arith.constant 0 : index
    %c0_4 = arith.constant 0 : index
    %3 = vector.load %arg3[%c0_3, %c0_4] : memref<1x256xf32, #tpu.memory_space<vmem>>, vector<1x256xf32>
    %4 = vector.broadcast %3 : vector<1x256xf32> to vector<8x256xf32>
    %5 = arith.addf %2, %4 : vector<8x256xf32>
    %cst_5 = arith.constant 0.000000e+00 : f32
    %6 = vector.broadcast %cst_5 : f32 to vector<8x256xf32>
    %7 = arith.maximumf %5, %6 : vector<8x256xf32>
    %c0_6 = arith.constant 0 : index
    %c0_7 = arith.constant 0 : index
    %8 = vector.load %arg4[%c0_6, %c0_7] : memref<256x128xf32, #tpu.memory_space<vmem>>, vector<256x128xf32>
    %cst_8 = arith.constant dense<0.000000e+00> : vector<8x128xf32>
    %9 = tpu.matmul %7, %8, %cst_8 {dimension_numbers = #tpu.dot_dimension_numbers<[1], [0], [0], [1], [0, 0, 1, 1], [], []>} : vector<8x256xf32>, vector<256x128xf32>, vector<8x128xf32> -> vector<8x128xf32>
    %c0_9 = arith.constant 0 : index
    %c0_10 = arith.constant 0 : index
    %10 = vector.load %arg5[%c0_9, %c0_10] : memref<1x128xf32, #tpu.memory_space<vmem>>, vector<1x128xf32>
    %11 = vector.broadcast %10 : vector<1x128xf32> to vector<8x128xf32>
    %12 = arith.addf %9, %11 : vector<8x128xf32>
    %cst_11 = arith.constant 0.000000e+00 : f32
    %13 = vector.broadcast %cst_11 : f32 to vector<8x128xf32>
    %14 = arith.maximumf %12, %13 : vector<8x128xf32>
    %15 = vector.extract_strided_slice %14 {offsets = [0, 0], sizes = [8, 64], strides = [1, 1]} : vector<8x128xf32> to vector<8x64xf32>
    %16 = vector.extract_strided_slice %14 {offsets = [0, 64], sizes = [8, 64], strides = [1, 1]} : vector<8x128xf32> to vector<8x64xf32>
    %17 = arith.mulf %15, %16 : vector<8x64xf32>
    %cst_12 = arith.constant dense<0.000000e+00> : vector<8xf32>
    %18 = vector.multi_reduction <add>, %17, %cst_12 [1] : vector<8x64xf32> to vector<8xf32>
    %19 = vector.shape_cast %18 : vector<8xf32> to vector<1x1x8xf32>
    %c0_13 = arith.constant 0 : index
    %c0_14 = arith.constant 0 : index
    %c0_15 = arith.constant 0 : index
    %20 = vector.load %arg6[%c0_13, %c0_14, %c0_15] : memref<1x1x8xf32, #tpu.memory_space<vmem>>, vector<1x1x8xf32>
    tpu.vector_store %arg6[%c0_13, %c0_14, %c0_15], %19 {strides = array<i32>} : memref<1x1x8xf32, #tpu.memory_space<vmem>>, vector<1x1x8xf32>,
    return
  }
  func.func @transform_0(%arg0: i32) -> (i32, i32) {
    %c0_i32 = arith.constant 0 : i32
    %c0_i32_0 = arith.constant 0 : i32
    return %arg0, %c0_i32 : i32, i32
  }
  func.func @transform_1(%arg0: i32) -> (i32, i32) {
    %c0_i32 = arith.constant 0 : i32
    %c0_i32_0 = arith.constant 0 : i32
    %c0_i32_1 = arith.constant 0 : i32
    return %c0_i32, %c0_i32_0 : i32, i32
  }
  func.func @transform_2(%arg0: i32) -> (i32, i32) {
    %c0_i32 = arith.constant 0 : i32
    %c0_i32_0 = arith.constant 0 : i32
    %c0_i32_1 = arith.constant 0 : i32
    return %c0_i32, %c0_i32_0 : i32, i32
  }
  func.func @transform_3(%arg0: i32) -> (i32, i32) {
    %c0_i32 = arith.constant 0 : i32
    %c0_i32_0 = arith.constant 0 : i32
    %c0_i32_1 = arith.constant 0 : i32
    return %c0_i32, %c0_i32_0 : i32, i32
  }
  func.func @transform_4(%arg0: i32) -> (i32, i32) {
    %c0_i32 = arith.constant 0 : i32
    %c0_i32_0 = arith.constant 0 : i32
    %c0_i32_1 = arith.constant 0 : i32
    return %c0_i32, %c0_i32_0 : i32, i32
  }
  func.func @transform_5(%arg0: i32) -> (i32, i32, i32) {
    %c0_i32 = arith.constant 0 : i32
    %c0_i32_0 = arith.constant 0 : i32
    %c0_i32_1 = arith.constant 0 : i32
    return %arg0, %c0_i32, %c0_i32_0 : i32, i32, i32
  }
}

</mosaic_0001>

<llo_original>
// kernel: two_tower_forward.2
$region0: #{two_tower_forward.2}
  #allocation0 [shape = 'u32[]', space=smem, size = 0x4, offset = 0x4, fixed_abs, tag = 'smem constant byte address 0x4 - core index']
  #allocation1 [shape = 'u32[144,128]{1,0:T(1,128)}', space=vmem, size = 0x12000, scoped, tag = 'internal scratch']
  #allocation2 [shape = 'u32[2048]{0}', space=vmem, size = 0x2000, scoped, tag = 'scoped memory for two_tower_forward.2']
  #allocation3 [shape = 'u32[2048]{0}', space=vmem, size = 0x2000, scoped, tag = 'scoped memory for two_tower_forward.2']
  #allocation4 [shape = 'u32[2048]{0}', space=vmem, size = 0x2000, scoped, tag = 'scoped memory for two_tower_forward.2']
  #allocation5 [shape = 'u32[2048]{0}', space=vmem, size = 0x2000, scoped, tag = 'scoped memory for two_tower_forward.2']
  #allocation6 [shape = 'u32[2048]{0}', space=vmem, size = 0x2000, scoped, tag = 'scoped memory for two_tower_forward.2']
  #allocation7 [shape = 'u32[2048]{0}', space=vmem, size = 0x2000, scoped, tag = 'scoped memory for two_tower_forward.2']
  #allocation8 [shape = 'u32[2048]{0}', space=vmem, size = 0x2000, scoped, tag = 'scoped memory for two_tower_forward.2']
  #allocation9 [shape = 'u32[2048]{0}', space=vmem, size = 0x2000, scoped, tag = 'scoped memory for two_tower_forward.2']
  #allocation10 [shape = 'u32[2048]{0}', space=vmem, size = 0x2000, scoped, tag = 'scoped memory for two_tower_forward.2']
  #allocation11 [shape = 'u32[2048]{0}', space=vmem, size = 0x2000, scoped, tag = 'scoped memory for two_tower_forward.2']
  %s0 = inlined_call_operand.vmem [shape: f32[256,256], index: 0, kind: input, shape index: {}]
  %s1 = inlined_call_operand.vmem [shape: f32[1,256], index: 1, kind: input, shape index: {}]
  %s2 = inlined_call_operand.vmem [shape: f32[256,128], index: 2, kind: input, shape index: {}]
  %s3 = inlined_call_operand.vmem [shape: f32[1,128], index: 3, kind: input, shape index: {}]
  %s4 = inlined_call_operand.vmem [shape: f32[8,100], index: 4, kind: input, shape index: {}]
  %s5 = inlined_call_operand.<no memory space> [shape: f32[], index: 5, kind: input, shape index: {}]
  %s6 = inlined_call_operand.vmem [shape: f32[8,128], index: 6, kind: input, shape index: {}]
  %s7 = inlined_call_operand.<no memory space> [shape: f32[], index: 7, kind: input, shape index: {}]
  %s8 = inlined_call_operand.<no memory space> [shape: s32[], index: 8, kind: input, shape index: {}]
  %s9 = inlined_call_operand.hbm [shape: f32[1,1,8], index: 9, kind: output, shape index: {}]
  %s10 = sld [smem:[#allocation0]]
  $region34: #{two_tower_forward.2} parent=0
    _
  %s12 = ssub.s32 1, %s10
  %s13 = scalar_select 0, %s12, %s10
  %v14 = vstv %s5
  %v15 = vstv %s7
  %v16 = vstv %s7
  %v17 = vstv %s8
  $region1: #{two_tower_forward.2} parent=0
    #allocation12 [shape = 'u8[512]{0}', space=vmem, size = 0x400, scoped, tag = 'output window, operand 0, single buffered']
    #allocation13 [shape = 's32[1]{0}', space=sflag, size = 0x4, scoped, tag = 'scoped memory for two_tower_forward.2']
    #allocation14 [shape = 'u8[8192]{0}', space=vmem, size = 0x2000, dematerialized = true, scoped, tag = 'FusionAdapter Buffer %select_maximum_fusion.2 = f32[8,256]{1,0:T(8,128)} fusion(%param_4.19, %param_5.23, %param_6.12, %param_7.4, %param_8.4), kind=kLoop, calls=%fused_computation.13.clone.clone, metadata={op_name="jit(two_tower_forward)/concatenate" stack_frame_id=33}']
    %18 = vsyncpa [#allocation13], 0
    // Predicated region
    $region2: #{two_tower_forward.2} parent=1 // pred_check
      _
    $region3: #{two_tower_forward.2} parent=1 // pred_check_branch
      %20 = sbr.rel (0) target = $region5
    $region4: #{two_tower_forward.2} parent=1 // pred_region
      _
    $region5: #{two_tower_forward.2} parent=1 // pred_fallthru
      _
    // Predicated region
    $region6: #{two_tower_forward.2} parent=1 // pred_check
      _
    $region7: #{two_tower_forward.2} parent=1 // pred_check_branch
      %22 = sbr.rel (0) target = $region9
    $region8: #{two_tower_forward.2} parent=1 // pred_region
      %s24 = ssub.s32 1, 0
      %s25 = smul.u32 128, %s24
      %p26 = scmp.lt.s32.totalorder 0, 0
      %s27 = scalar_select %p26, 0, 0
      %s28 = smul.addr %s27, 8
      %s29 = scalar_lea.vmem %s6, %s28
      %s31 = ssub.s32 1, 0
      %s32 = smul.u32 128, %s31
    $region9: #{two_tower_forward.2} parent=1 // pred_fallthru
      _
    // Predicated region
    $region10: #{two_tower_forward.2} parent=1 // pred_check
      _
    $region11: #{two_tower_forward.2} parent=1 // pred_check_branch
      %34 = sbr.rel (0) target = $region13
    $region12: #{two_tower_forward.2} parent=1 // pred_region
      _
    $region13: #{two_tower_forward.2} parent=1 // pred_fallthru
      _
    // Predicated region
    $region14: #{two_tower_forward.2} parent=1 // pred_check
      _
    $region15: #{two_tower_forward.2} parent=1 // pred_check_branch
      %36 = sbr.rel (0) target = $region17
    $region16: #{two_tower_forward.2} parent=1 // pred_region
      _
    $region17: #{two_tower_forward.2} parent=1 // pred_fallthru
      _
    // Predicated region
    $region18: #{two_tower_forward.2} parent=1 // pred_check
      _
    $region19: #{two_tower_forward.2} parent=1 // pred_check_branch
      %38 = sbr.rel (0) target = $region21
    $region20: #{two_tower_forward.2} parent=1 // pred_region
      _
    $region21: #{two_tower_forward.2} parent=1 // pred_fallthru
      _
    // Predicated region
    $region22: #{two_tower_forward.2} parent=1 // pred_check
      _
    $region23: #{two_tower_forward.2} parent=1 // pred_check_branch
      %40 = sbr.rel (0) target = $region25
    $region24: #{two_tower_forward.2} parent=1 // pred_region
      _
    $region25: #{two_tower_forward.2} parent=1 // pred_fallthru
      _
    %s42 = ssub.s32 1, 0
    %s43 = smul.u32 128, %s42
    %p44 = scmp.lt.s32.totalorder 0, 0
    %s45 = scalar_select %p44, 0, 0
    %s46 = smul.addr %s45, 8
    %s47 = scalar_lea.vmem %s6, %s46
    %s49 = ssub.s32 1, 0
    %s50 = smul.u32 128, %s49
    %p51 = scmp.lt.s32.totalorder 0, 0
    %s52 = scalar_select %p51, 0, 0
    %s53 = smul.addr %s52, 8
    %s54 = scalar_lea.vmem %s6, %s53
    %s56 = ssub.s32 1, 0
    %s57 = smul.u32 128, %s56
    %v58 = vld [vmem:[%s4] sm:$0xff]
    %v59 = vlaneseq
    %v60 = vand.u32 %v59, 127
    %vm62 = vcmp.lt.s32.totalorder %v60, 100
    %v63 = vsel %vm62, %v58, %v14
    %s64 = ssub.s32 0, 0
    %p65 = scmp.lt.s32.totalorder %s64, 0
    %s66 = scalar_select %p65, 0, 255
    %v67 = vld [vmem:[%s54] sm:%s66]
    %v68 = vlaneseq
    %v69 = vand.u32 %v68, 127
    %72 = xla_tuple %v69, %v17
    %73 = xla_tuple %72
    %vm74 = vcmp.lt.s32.totalorder %v69, %v17
    %v75 = vsel %vm74, 1, 0
    %76 = xla_tuple %v75
    %77 = xla_tuple %v75, %v63, %v16
    %78 = xla_tuple %77
    %v79 = vsel %vm74, %v63, %v16
    %80 = xla_tuple %v79
    %81 = xla_tuple %v79, %v15
    %82 = xla_tuple %81
    %v83 = vmax.f32 %v79, %v15
    %84 = xla_tuple %v83
    %s86 = ssub.s32 256, 1
    %87 = vst [vmem:[#allocation14] sm:%s86] %v83
    %v88 = vlaneseq
    %v89 = vand.u32 %v88, 127
    %v91 = vadd.s32 %v89, 128
    %92 = xla_tuple %v91, %v17
    %93 = xla_tuple %92
    %vm94 = vcmp.lt.s32.totalorder %v91, %v17
    %v95 = vsel %vm94, 1, 0
    %96 = xla_tuple %v95
    %97 = xla_tuple %v95, %v14, %v16
    %98 = xla_tuple %97
    %v99 = vsel %vm94, %v14, %v16
    %100 = xla_tuple %v99
    %101 = xla_tuple %v99, %v67
    %102 = xla_tuple %101
    %v103 = vmax.f32 %v99, %v67
    %104 = xla_tuple %v103
    %s105 = scalar_lea.vmem [#allocation14], 8
    %s107 = ssub.s32 256, 1
    %108 = vst [vmem:[%s105] sm:%s107] %v103
    %v109 = vld [vmem:[#allocation14] sm:$0xff]
    %v110 = vld [vmem:[#allocation14 + $0x8] sm:$0xff]
    %v111 = vld [vmem:[%s0] sm:$0xff]
    %v112 = vld [vmem:[%s0 + $0x8] sm:$0xff]
    %v113 = vld [vmem:[%s0 + $0x10] sm:$0xff]
    %v114 = vld [vmem:[%s0 + $0x18] sm:$0xff]
    %v115 = vld [vmem:[%s0 + $0x20] sm:$0xff]
    %v116 = vld [vmem:[%s0 + $0x28] sm:$0xff]
    %v117 = vld [vmem:[%s0 + $0x30] sm:$0xff]
    %v118 = vld [vmem:[%s0 + $0x38] sm:$0xff]
    %v119 = vld [vmem:[%s0 + $0x40] sm:$0xff]
    %v120 = vld [vmem:[%s0 + $0x48] sm:$0xff]
    %v121 = vld [vmem:[%s0 + $0x50] sm:$0xff]
    %v122 = vld [vmem:[%s0 + $0x58] sm:$0xff]
    %v123 = vld [vmem:[%s0 + $0x60] sm:$0xff]
    %v124 = vld [vmem:[%s0 + $0x68] sm:$0xff]
    %v125 = vld [vmem:[%s0 + $0x70] sm:$0xff]
    %v126 = vld [vmem:[%s0 + $0x78] sm:$0xff]
    %v127 = vld [vmem:[%s0 + $0x80] sm:$0xff]
    %v128 = vld [vmem:[%s0 + $0x88] sm:$0xff]
    %v129 = vld [vmem:[%s0 + $0x90] sm:$0xff]
    %v130 = vld [vmem:[%s0 + $0x98] sm:$0xff]
    %v131 = vld [vmem:[%s0 + $0xa0] sm:$0xff]
    %v132 = vld [vmem:[%s0 + $0xa8] sm:$0xff]
    %v133 = vld [vmem:[%s0 + $0xb0] sm:$0xff]
    %v134 = vld [vmem:[%s0 + $0xb8] sm:$0xff]
    %v135 = vld [vmem:[%s0 + $0xc0] sm:$0xff]
    %v136 = vld [vmem:[%s0 + $0xc8] sm:$0xff]
    %v137 = vld [vmem:[%s0 + $0xd0] sm:$0xff]
    %v138 = vld [vmem:[%s0 + $0xd8] sm:$0xff]
    %v139 = vld [vmem:[%s0 + $0xe0] sm:$0xff]
    %v140 = vld [vmem:[%s0 + $0xe8] sm:$0xff]
    %v141 = vld [vmem:[%s0 + $0xf0] sm:$0xff]
    %v142 = vld [vmem:[%s0 + $0xf8] sm:$0xff]
    %v143 = vld [vmem:[%s0 + $0x100] sm:$0xff]
    %v144 = vld [vmem:[%s0 + $0x108] sm:$0xff]
    %v145 = vld [vmem:[%s0 + $0x110] sm:$0xff]
    %v146 = vld [vmem:[%s0 + $0x118] sm:$0xff]
    %v147 = vld [vmem:[%s0 + $0x120] sm:$0xff]
    %v148 = vld [vmem:[%s0 + $0x128] sm:$0xff]
    %v149 = vld [vmem:[%s0 + $0x130] sm:$0xff]
    %v150 = vld [vmem:[%s0 + $0x138] sm:$0xff]
    %v151 = vld [vmem:[%s0 + $0x140] sm:$0xff]
    %v152 = vld [vmem:[%s0 + $0x148] sm:$0xff]
    %v153 = vld [vmem:[%s0 + $0x150] sm:$0xff]
    %v154 = vld [vmem:[%s0 + $0x158] sm:$0xff]
    %v155 = vld [vmem:[%s0 + $0x160] sm:$0xff]
    %v156 = vld [vmem:[%s0 + $0x168] sm:$0xff]
    %v157 = vld [vmem:[%s0 + $0x170] sm:$0xff]
    %v158 = vld [vmem:[%s0 + $0x178] sm:$0xff]
    %v159 = vld [vmem:[%s0 + $0x180] sm:$0xff]
    %v160 = vld [vmem:[%s0 + $0x188] sm:$0xff]
    %v161 = vld [vmem:[%s0 + $0x190] sm:$0xff]
    %v162 = vld [vmem:[%s0 + $0x198] sm:$0xff]
    %v163 = vld [vmem:[%s0 + $0x1a0] sm:$0xff]
    %v164 = vld [vmem:[%s0 + $0x1a8] sm:$0xff]
    %v165 = vld [vmem:[%s0 + $0x1b0] sm:$0xff]
    %v166 = vld [vmem:[%s0 + $0x1b8] sm:$0xff]
    %v167 = vld [vmem:[%s0 + $0x1c0] sm:$0xff]
    %v168 = vld [vmem:[%s0 + $0x1c8] sm:$0xff]
    %v169 = vld [vmem:[%s0 + $0x1d0] sm:$0xff]
    %v170 = vld [vmem:[%s0 + $0x1d8] sm:$0xff]
    %v171 = vld [vmem:[%s0 + $0x1e0] sm:$0xff]
    %v172 = vld [vmem:[%s0 + $0x1e8] sm:$0xff]
    %v173 = vld [vmem:[%s0 + $0x1f0] sm:$0xff]
    %v174 = vld [vmem:[%s0 + $0x1f8] sm:$0xff]
    %v175 = vld [vmem:[%s1] sm:$0x3]
    %v177 = vlaneseq
    %v178 = vshrl.u32 %v177, 7
    %v179 = vsub.s32 0, %v178
    %v180 = vrot.slane %v175, %v179
    %v181 = vlaneseq
    %v182 = vshrl.u32 %v181, 7
    %v183 = vsub.s32 1, %v182
    %v184 = vrot.slane %v175, %v183
    %187 = vmatprep.subr.mxu0 %v142
    %188 = vmatpush1.msra.mxu0 %v141
    %189 = vmatprep.subr.mxu0 %v140
    %190 = vmatpush1.msra.mxu0 %v139
    %191 = vmatprep.subr.mxu0 %v138
    %192 = vmatpush1.msra.mxu0 %v137
    %193 = vmatprep.subr.mxu0 %v136
    %194 = vmatpush1.msra.mxu0 %v135
    %195 = vmatprep.subr.mxu0 %v134
    %196 = vmatpush1.msra.mxu0 %v133
    %197 = vmatprep.subr.mxu0 %v132
    %198 = vmatpush1.msra.mxu0 %v131
    %199 = vmatprep.subr.mxu0 %v130
    %200 = vmatpush1.msra.mxu0 %v129
    %201 = vmatprep.subr.mxu0 %v128
    %202 = vmatpush1.msra.mxu0 %v127
    %203 = vmatprep.subr.mxu0 %v126
    %204 = vmatpush1.msra.mxu0 %v125
    %205 = vmatprep.subr.mxu0 %v124
    %206 = vmatpush1.msra.mxu0 %v123
    %207 = vmatprep.subr.mxu0 %v122
    %208 = vmatpush1.msra.mxu0 %v121
    %209 = vmatprep.subr.mxu0 %v120
    %210 = vmatpush1.msra.mxu0 %v119
    %211 = vmatprep.subr.mxu0 %v118
    %212 = vmatpush1.msra.mxu0 %v117
    %213 = vmatprep.subr.mxu0 %v116
    %214 = vmatpush1.msra.mxu0 %v115
    %215 = vmatprep.subr.mxu0 %v114
    %216 = vmatpush1.msra.mxu0 %v113
    %217 = vmatprep.subr.mxu0 %v112
    %218 = vmatpush1.msra.mxu0 %v111
    %219 = vmatprep.subr.mxu0 %v174
    %220 = vmatpush2.msra.mxu0 %v173
    %221 = vmatprep.subr.mxu0 %v172
    %222 = vmatpush2.msra.mxu0 %v171
    %223 = vmatprep.subr.mxu0 %v170
    %224 = vmatpush2.msra.mxu0 %v169
    %225 = vmatprep.subr.mxu0 %v168
    %226 = vmatpush2.msra.mxu0 %v167
    %227 = vmatprep.subr.mxu0 %v166
    %228 = vmatpush2.msra.mxu0 %v165
    %229 = vmatprep.subr.mxu0 %v164
    %230 = vmatpush2.msra.mxu0 %v163
    %231 = vmatprep.subr.mxu0 %v162
    %232 = vmatpush2.msra.mxu0 %v161
    %233 = vmatprep.subr.mxu0 %v160
    %234 = vmatpush2.msra.mxu0 %v159
    %235 = vmatprep.subr.mxu0 %v158
    %236 = vmatpush2.msra.mxu0 %v157
    %237 = vmatprep.subr.mxu0 %v156
    %238 = vmatpush2.msra.mxu0 %v155
    %239 = vmatprep.subr.mxu0 %v154
    %240 = vmatpush2.msra.mxu0 %v153
    %241 = vmatprep.subr.mxu0 %v152
    %242 = vmatpush2.msra.mxu0 %v151
    %243 = vmatprep.subr.mxu0 %v150
    %244 = vmatpush2.msra.mxu0 %v149
    %245 = vmatprep.subr.mxu0 %v148
    %246 = vmatpush2.msra.mxu0 %v147
    %247 = vmatprep.subr.mxu0 %v146
    %248 = vmatpush2.msra.mxu0 %v145
    %249 = vmatprep.subr.mxu0 %v144
    %250 = vmatpush2.msra.mxu0 %v143
    %251 = vmatprep.mubr.f32.mxu0 %v110
    %252 = vmatmul.mubr.f32.gmra.mxu0 %v109
    %v253 = vpop.f32.mrf.mxu0
    %v254 = vadd.f32 %v180, %v253
    %v255 = vpop.f32.mrf.mxu0
    %v256 = vadd.f32 %v184, %v255
    %257 = vdwg.mxu0
    %v258 = vmax.f32 %v254, 0.0
    %v259 = vmax.f32 %v256, 0.0
    %v260 = vld [vmem:[%s2] sm:$0xff]
    %v261 = vld [vmem:[%s2 + $0x8] sm:$0xff]
    %v262 = vld [vmem:[%s2 + $0x10] sm:$0xff]
    %v263 = vld [vmem:[%s2 + $0x18] sm:$0xff]
    %v264 = vld [vmem:[%s2 + $0x20] sm:$0xff]
    %v265 = vld [vmem:[%s2 + $0x28] sm:$0xff]
    %v266 = vld [vmem:[%s2 + $0x30] sm:$0xff]
    %v267 = vld [vmem:[%s2 + $0x38] sm:$0xff]
    %v268 = vld [vmem:[%s2 + $0x40] sm:$0xff]
    %v269 = vld [vmem:[%s2 + $0x48] sm:$0xff]
    %v270 = vld [vmem:[%s2 + $0x50] sm:$0xff]
    %v271 = vld [vmem:[%s2 + $0x58] sm:$0xff]
    %v272 = vld [vmem:[%s2 + $0x60] sm:$0xff]
    %v273 = vld [vmem:[%s2 + $0x68] sm:$0xff]
    %v274 = vld [vmem:[%s2 + $0x70] sm:$0xff]
    %v275 = vld [vmem:[%s2 + $0x78] sm:$0xff]
    %v276 = vld [vmem:[%s2 + $0x80] sm:$0xff]
    %v277 = vld [vmem:[%s2 + $0x88] sm:$0xff]
    %v278 = vld [vmem:[%s2 + $0x90] sm:$0xff]
    %v279 = vld [vmem:[%s2 + $0x98] sm:$0xff]
    %v280 = vld [vmem:[%s2 + $0xa0] sm:$0xff]
    %v281 = vld [vmem:[%s2 + $0xa8] sm:$0xff]
    %v282 = vld [vmem:[%s2 + $0xb0] sm:$0xff]
    %v283 = vld [vmem:[%s2 + $0xb8] sm:$0xff]
    %v284 = vld [vmem:[%s2 + $0xc0] sm:$0xff]
    %v285 = vld [vmem:[%s2 + $0xc8] sm:$0xff]
    %v286 = vld [vmem:[%s2 + $0xd0] sm:$0xff]
    %v287 = vld [vmem:[%s2 + $0xd8] sm:$0xff]
    %v288 = vld [vmem:[%s2 + $0xe0] sm:$0xff]
    %v289 = vld [vmem:[%s2 + $0xe8] sm:$0xff]
    %v290 = vld [vmem:[%s2 + $0xf0] sm:$0xff]
    %v291 = vld [vmem:[%s2 + $0xf8] sm:$0xff]
    %v292 = vld [vmem:[%s3] sm:$0x1]
    %v294 = vlaneseq
    %v295 = vshrl.u32 %v294, 7
    %v296 = vsub.s32 0, %v295
    %v297 = vrot.slane %v292, %v296
    %299 = vmatprep.subr.mxu0 0.0
    %300 = vmatpush1.msra.mxu0 %v275
    %301 = vmatprep.subr.mxu0 0.0
    %302 = vmatpush1.msra.mxu0 %v274
    %303 = vmatprep.subr.mxu0 0.0
    %304 = vmatpush1.msra.mxu0 %v273
    %305 = vmatprep.subr.mxu0 0.0
    %306 = vmatpush1.msra.mxu0 %v272
    %307 = vmatprep.subr.mxu0 0.0
    %308 = vmatpush1.msra.mxu0 %v271
    %309 = vmatprep.subr.mxu0 0.0
    %310 = vmatpush1.msra.mxu0 %v270
    %311 = vmatprep.subr.mxu0 0.0
    %312 = vmatpush1.msra.mxu0 %v269
    %313 = vmatprep.subr.mxu0 0.0
    %314 = vmatpush1.msra.mxu0 %v268
    %315 = vmatprep.subr.mxu0 0.0
    %316 = vmatpush1.msra.mxu0 %v267
    %317 = vmatprep.subr.mxu0 0.0
    %318 = vmatpush1.msra.mxu0 %v266
    %319 = vmatprep.subr.mxu0 0.0
    %320 = vmatpush1.msra.mxu0 %v265
    %321 = vmatprep.subr.mxu0 0.0
    %322 = vmatpush1.msra.mxu0 %v264
    %323 = vmatprep.subr.mxu0 0.0
    %324 = vmatpush1.msra.mxu0 %v263
    %325 = vmatprep.subr.mxu0 0.0
    %326 = vmatpush1.msra.mxu0 %v262
    %327 = vmatprep.subr.mxu0 0.0
    %328 = vmatpush1.msra.mxu0 %v261
    %329 = vmatprep.subr.mxu0 0.0
    %330 = vmatpush1.msra.mxu0 %v260
    %331 = vmatprep.subr.mxu0 0.0
    %332 = vmatpush2.msra.mxu0 %v291
    %333 = vmatprep.subr.mxu0 0.0
    %334 = vmatpush2.msra.mxu0 %v290
    %335 = vmatprep.subr.mxu0 0.0
    %336 = vmatpush2.msra.mxu0 %v289
    %337 = vmatprep.subr.mxu0 0.0
    %338 = vmatpush2.msra.mxu0 %v288
    %339 = vmatprep.subr.mxu0 0.0
    %340 = vmatpush2.msra.mxu0 %v287
    %341 = vmatprep.subr.mxu0 0.0
    %342 = vmatpush2.msra.mxu0 %v286
    %343 = vmatprep.subr.mxu0 0.0
    %344 = vmatpush2.msra.mxu0 %v285
    %345 = vmatprep.subr.mxu0 0.0
    %346 = vmatpush2.msra.mxu0 %v284
    %347 = vmatprep.subr.mxu0 0.0
    %348 = vmatpush2.msra.mxu0 %v283
    %349 = vmatprep.subr.mxu0 0.0
    %350 = vmatpush2.msra.mxu0 %v282
    %351 = vmatprep.subr.mxu0 0.0
    %352 = vmatpush2.msra.mxu0 %v281
    %353 = vmatprep.subr.mxu0 0.0
    %354 = vmatpush2.msra.mxu0 %v280
    %355 = vmatprep.subr.mxu0 0.0
    %356 = vmatpush2.msra.mxu0 %v279
    %357 = vmatprep.subr.mxu0 0.0
    %358 = vmatpush2.msra.mxu0 %v278
    %359 = vmatprep.subr.mxu0 0.0
    %360 = vmatpush2.msra.mxu0 %v277
    %361 = vmatprep.subr.mxu0 0.0
    %362 = vmatpush2.msra.mxu0 %v276
    %363 = vmatprep.mubr.f32.mxu0 %v259
    %364 = vmatmul.mubr.f32.gmra.mxu0 %v258
    %v365 = vpop.f32.mrf.mxu0
    %v366 = vadd.f32 %v297, %v365
    %v367 = vpop.f32.mrf.mxu0
    %368 = vdwg.mxu0
    %v369 = vmax.f32 %v366, 0.0
    %371 = vrot.lane.b32.xlu0 %v369, 64
    %v372 = vpop.permute.xlu0 %371
    %v374 = vmul.f32 %v369, %v372
    %vm375 = vcmask 523264
    %v376 = vsel %vm375, %v374, 0.0
    %377 = vadd.xlane.f32.xlu0 %v376
    %v378 = vpop.xlane.xlu0 %377
    %v380 = vlaneseq
    %v381 = vand.u32 %v380, 127
    %v382 = vlaneseq
    %v383 = vshrl.u32 %v382, 7
    %v384 = vsub.s32 %v381, %v383
    %v385 = vrot.slane %v378, %v384
    %vm387 = vcmask 57344
    %388 = vst.msk [vmem:[#allocation12] sm:$0x1] %vm387, %v385
    // Predicated region
    $region26: #{two_tower_forward.2} parent=1 // pred_check
      _
    $region27: #{two_tower_forward.2} parent=1 // pred_check_branch
      %390 = sbr.rel (0) target = $region29
    $region28: #{two_tower_forward.2} parent=1 // pred_region
      %s392 = ssub.s32 16, 16
      %393 = vsyncadd [#allocation13], %s392
      %s395 = sshll.u32 [#allocation12], 4
      %s396 = int_to_ptr.vmem [resolvable:$true] %s395
      %398 = dma.vmem_to_hbm [thread:$0]  %s396, 16, %s9, [#allocation13]
    $region29: #{two_tower_forward.2} parent=1 // pred_fallthru
      _
    // Predicated region
    $region30: #{two_tower_forward.2} parent=1 // pred_check
      _
    $region31: #{two_tower_forward.2} parent=1 // pred_check_branch
      %400 = sbr.rel (0) target = $region33
    $region32: #{two_tower_forward.2} parent=1 // pred_region
      %401 = dma.done [#allocation13], 16
    $region33: #{two_tower_forward.2} parent=1 // pred_fallthru
      _
    %402 = vsyncpa [#allocation13], 1

</llo_original>
